<compile_context>
chip_gen: v7x
topology: tpu7x:2x2x1
jax: 0.10.0
libtpu: 0.0.40
codegen_flags: <defaults>
</compile_context>

<pallas_src>
import functools

import jax
import jax.numpy as jnp
from jax.experimental import pallas as pl
from jax.experimental.pallas import tpu as pltpu


# ---------------------------------------------------------------------------
# Padded geometry (TPU-native: sublane multiple of 8, lane multiple of 128).
# ---------------------------------------------------------------------------
def _round_up(n: int, m: int) -> int:
    return ((n + m - 1) // m) * m


# ---------------------------------------------------------------------------
# Kernel: fused 3-layer MLP on one (TB, S_PAD) batch tile. All operands are
# full, lane-aligned VMEM blocks; weights are grid-invariant (resident).
# ---------------------------------------------------------------------------
def qnetwork_kernel(x_ref, w1_ref, b1_ref, w2_ref, b2_ref, w3_ref, b3_ref,
                    out_ref):
    x = x_ref[...]                                              # (TB, S_PAD)
    h1 = jnp.dot(x, w1_ref[...],
                 preferred_element_type=jnp.float32) + b1_ref[...]
    h1 = jnp.maximum(h1, 0.0)                                   # (TB, 128)
    h2 = jnp.dot(h1, w2_ref[...],
                 preferred_element_type=jnp.float32) + b2_ref[...]
    h2 = jnp.maximum(h2, 0.0)                                   # (TB, 128)
    q = jnp.dot(h2, w3_ref[...],
                preferred_element_type=jnp.float32) + b3_ref[...]
    # Lane-dense (TB, 128) store; real Q-values live in lanes [0, action_size).
    out_ref[...] = q.astype(out_ref.dtype)
    # TODO(synk): optionally fuse greedy-action argmax / TD-target math here
    # for a full DQN step (extra VPU/XLU work rides in idle slots).


# ---------------------------------------------------------------------------
# Wrapper: pads batch, launches a 1-D grid over the batch axis, slices the
# padded lane-dense output back to (B, action_size). jit-cached per shape.
# ---------------------------------------------------------------------------
@functools.partial(jax.jit, static_argnames=("action_size", "block_b"))
def qnetwork_forward(state, padded_params, action_size, *, block_b=512):
    """state: (B, state_size) f32; padded_params from pad_params()."""
    w1, b1 = padded_params["w1"], padded_params["b1"]
    w2, b2 = padded_params["w2"], padded_params["b2"]
    w3, b3 = padded_params["w3"], padded_params["b3"]

    B, S = state.shape
    s_pad, h1_pad = w1.shape
    h2_pad = w2.shape[1]
    a_pad = w3.shape[1]

    # Batch tile: multiple of 8 sublanes, capped at block_b.
    tb = min(block_b, _round_up(B, 8))
    b_pad = _round_up(B, tb)

    # Pad state once: (B, S) -> (b_pad, s_pad), zeros elsewhere.
    x = jnp.pad(state.astype(jnp.float32),
                ((0, b_pad - B), (0, s_pad - S)))

    grid = (b_pad // tb,)

    # Weights/biases: full single blocks, index_map pinned to (0, 0) so they
    # stay resident in VMEM across every grid step.
    def w_spec(shape):
        return pl.BlockSpec(shape, lambda i: (0, 0))

    out = pl.pallas_call(
        qnetwork_kernel,
        out_shape=jax.ShapeDtypeStruct((b_pad, a_pad), jnp.float32),
        grid=grid,
        in_specs=[
            pl.BlockSpec((tb, s_pad), lambda i: (i, 0)),   # state tile
            w_spec((s_pad, h1_pad)),                       # w1
            w_spec((1, h1_pad)),                           # b1
            w_spec((h1_pad, h2_pad)),                      # w2
            w_spec((1, h2_pad)),                           # b2
            w_spec((h2_pad, a_pad)),                       # w3
            w_spec((1, a_pad)),                            # b3
        ],
        out_specs=pl.BlockSpec((tb, a_pad), lambda i: (i, 0)),
        compiler_params=pltpu.CompilerParams(
            dimension_semantics=("parallel",)),            # 2x on v7x megacore
    )(x, w1, b1, w2, b2, w3, b3)

    # Free layout plumbing: drop batch padding and padded action lanes.
    return out[:B, :action_size]


# ---------------------------------------------------------------------------
# Parameter init (torch.nn.Linear-style U(-1/sqrt(fan_in), 1/sqrt(fan_in)))
# and one-time zero-padding to TPU-native shapes.
# ---------------------------------------------------------------------------
def init_params(key, state_size=4, linear1_units=120, linear2_units=84,
                action_size=2):
    ks = jax.random.split(key, 6)

    def linear_init(kw, kb, fan_in, fan_out):
        bound = 1.0 / jnp.sqrt(jnp.float32(fan_in))
        w = jax.random.uniform(kw, (fan_in, fan_out), jnp.float32,
                               minval=-bound, maxval=bound)
        b = jax.random.uniform(kb, (1, fan_out), jnp.float32,
                               minval=-bound, maxval=bound)
        return w, b

    w1, b1 = linear_init(ks[0], ks[1], state_size, linear1_units)
    w2, b2 = linear_init(ks[2], ks[3], linear1_units, linear2_units)
    w3, b3 = linear_init(ks[4], ks[5], linear2_units, action_size)
    return {"w1": w1, "b1": b1, "w2": w2, "b2": b2, "w3": w3, "b3": b3}


def pad_params(params, dtype=jnp.float32):
    """Zero-pad (in, out) weights / (1, out) biases to (8k, 128k) shapes.

    Done once at init time, not per forward call. `dtype=jnp.bfloat16` is a
    valid option (f32 accumulation is kept inside the kernel) and is
    especially beneficial on v5e's bf16-native MXU.
    """
    def pad2(a, rows, cols):
        out = jnp.zeros((rows, cols), dtype)
        return out.at[:a.shape[0], :a.shape[1]].set(a.astype(dtype))

    s, h1 = params["w1"].shape
    h2 = params["w2"].shape[1]
    a = params["w3"].shape[1]
    s_p = _round_up(s, 8)
    h1_p = _round_up(h1, 128)
    h2_p = _round_up(h2, 128)
    a_p = _round_up(a, 128)
    return {
        "w1": pad2(params["w1"], s_p, h1_p),
        "b1": pad2(params["b1"], 1, h1_p),
        "w2": pad2(params["w2"], h1_p, h2_p),
        "b2": pad2(params["b2"], 1, h2_p),
        "w3": pad2(params["w3"], h2_p, a_p),
        "b3": pad2(params["b3"], 1, a_p),
    }


def qnetwork_reference(state, params):
    h1 = jnp.maximum(state @ params["w1"] + params["b1"], 0.0)
    h2 = jnp.maximum(h1 @ params["w2"] + params["b2"], 0.0)
    return h2 @ params["w3"] + params["b3"]


if __name__ == "__main__":
    key = jax.random.PRNGKey(0)
    k_param, k_small, k_big = jax.random.split(key, 3)

    state_size = 4      # CartPole observation: [pos, vel, angle, ang_vel]
    action_size = 2     # CartPole actions: left / right

    params = init_params(k_param, state_size=state_size,
                         linear1_units=120, linear2_units=84,
                         action_size=action_size)
    padded = pad_params(params)

    # Small batch (single-tile grid), as in the original spec.
    batch = 8
    state = jax.random.normal(k_small, (batch, state_size), jnp.float32)
    q_vals = jax.block_until_ready(
        qnetwork_forward(state, padded, action_size))
    q_ref = qnetwork_reference(state, params)
    assert q_vals.shape == (batch, action_size)
    assert jnp.allclose(q_vals, q_ref, atol=1e-4, rtol=1e-4), \
        "small-batch mismatch vs reference"

    # Larger (non-multiple-of-tile) batch to exercise the batch grid +
    # resident weights + batch padding path.
    big_batch = 500
    state_big = jax.random.normal(k_big, (big_batch, state_size), jnp.float32)
    q_big = jax.block_until_ready(
        qnetwork_forward(state_big, padded, action_size, block_b=256))
    q_big_ref = qnetwork_reference(state_big, params)
    assert q_big.shape == (big_batch, action_size)
    assert jnp.allclose(q_big, q_big_ref, atol=1e-4, rtol=1e-4), \
        "large-batch mismatch vs reference"

    print("KERNEL_OK")
</pallas_src>

<mosaic_0001>
module attributes {stable_mosaic.version = 11 : i64} {
  func.func @qnetwork_kernel(%arg0: i32, %arg1: memref<8x8xf32, #tpu.memory_space<vmem>>, %arg2: memref<8x128xf32, #tpu.memory_space<vmem>>, %arg3: memref<1x128xf32, #tpu.memory_space<vmem>>, %arg4: memref<128x128xf32, #tpu.memory_space<vmem>>, %arg5: memref<1x128xf32, #tpu.memory_space<vmem>>, %arg6: memref<128x128xf32, #tpu.memory_space<vmem>>, %arg7: memref<1x128xf32, #tpu.memory_space<vmem>>, %arg8: memref<8x128xf32, #tpu.memory_space<vmem>>) attributes {dimension_semantics = [#tpu.dimension_semantics<parallel>], iteration_bounds = array<i64: 1>, scalar_prefetch = 0 : i64, scratch_operands = 0 : i64, tpu.core_type = #tpu.core_type<tc>, window_params = [{transform_indices = @transform_0, window_bounds = array<i64: 8, 8>}, {pipeline_mode = #tpu.pipeline_mode<synchronous>, transform_indices = @transform_1, window_bounds = array<i64: 8, 128>}, {pipeline_mode = #tpu.pipeline_mode<synchronous>, transform_indices = @transform_2, window_bounds = array<i64: 1, 128>}, {pipeline_mode = #tpu.pipeline_mode<synchronous>, transform_indices = @transform_3, window_bounds = array<i64: 128, 128>}, {pipeline_mode = #tpu.pipeline_mode<synchronous>, transform_indices = @transform_4, window_bounds = array<i64: 1, 128>}, {pipeline_mode = #tpu.pipeline_mode<synchronous>, transform_indices = @transform_5, window_bounds = array<i64: 128, 128>}, {pipeline_mode = #tpu.pipeline_mode<synchronous>, transform_indices = @transform_6, window_bounds = array<i64: 1, 128>}, {transform_indices = @transform_7, window_bounds = array<i64: 8, 128>}]} {
    %c0 = arith.constant 0 : index
    %c0_0 = arith.constant 0 : index
    %0 = vector.load %arg1[%c0, %c0_0] : memref<8x8xf32, #tpu.memory_space<vmem>>, vector<8x8xf32>
    %c0_1 = arith.constant 0 : index
    %c0_2 = arith.constant 0 : index
    %1 = vector.load %arg2[%c0_1, %c0_2] : memref<8x128xf32, #tpu.memory_space<vmem>>, vector<8x128xf32>
    %cst = arith.constant dense<0.000000e+00> : vector<8x128xf32>
    %2 = tpu.matmul %0, %1, %cst {dimension_numbers = #tpu.dot_dimension_numbers<[1], [0], [0], [1], [0, 0, 1, 1], [], []>} : vector<8x8xf32>, vector<8x128xf32>, vector<8x128xf32> -> vector<8x128xf32>
    %c0_3 = arith.constant 0 : index
    %c0_4 = arith.constant 0 : index
    %3 = vector.load %arg3[%c0_3, %c0_4] : memref<1x128xf32, #tpu.memory_space<vmem>>, vector<1x128xf32>
    %4 = vector.broadcast %3 : vector<1x128xf32> to vector<8x128xf32>
    %5 = arith.addf %2, %4 : vector<8x128xf32>
    %cst_5 = arith.constant 0.000000e+00 : f32
    %6 = vector.broadcast %cst_5 : f32 to vector<8x128xf32>
    %7 = arith.maximumf %5, %6 : vector<8x128xf32>
    %c0_6 = arith.constant 0 : index
    %c0_7 = arith.constant 0 : index
    %8 = vector.load %arg4[%c0_6, %c0_7] : memref<128x128xf32, #tpu.memory_space<vmem>>, vector<128x128xf32>
    %cst_8 = arith.constant dense<0.000000e+00> : vector<8x128xf32>
    %9 = tpu.matmul %7, %8, %cst_8 {dimension_numbers = #tpu.dot_dimension_numbers<[1], [0], [0], [1], [0, 0, 1, 1], [], []>} : vector<8x128xf32>, vector<128x128xf32>, vector<8x128xf32> -> vector<8x128xf32>
    %c0_9 = arith.constant 0 : index
    %c0_10 = arith.constant 0 : index
    %10 = vector.load %arg5[%c0_9, %c0_10] : memref<1x128xf32, #tpu.memory_space<vmem>>, vector<1x128xf32>
    %11 = vector.broadcast %10 : vector<1x128xf32> to vector<8x128xf32>
    %12 = arith.addf %9, %11 : vector<8x128xf32>
    %cst_11 = arith.constant 0.000000e+00 : f32
    %13 = vector.broadcast %cst_11 : f32 to vector<8x128xf32>
    %14 = arith.maximumf %12, %13 : vector<8x128xf32>
    %c0_12 = arith.constant 0 : index
    %c0_13 = arith.constant 0 : index
    %15 = vector.load %arg6[%c0_12, %c0_13] : memref<128x128xf32, #tpu.memory_space<vmem>>, vector<128x128xf32>
    %cst_14 = arith.constant dense<0.000000e+00> : vector<8x128xf32>
    %16 = tpu.matmul %14, %15, %cst_14 {dimension_numbers = #tpu.dot_dimension_numbers<[1], [0], [0], [1], [0, 0, 1, 1], [], []>} : vector<8x128xf32>, vector<128x128xf32>, vector<8x128xf32> -> vector<8x128xf32>
    %c0_15 = arith.constant 0 : index
    %c0_16 = arith.constant 0 : index
    %17 = vector.load %arg7[%c0_15, %c0_16] : memref<1x128xf32, #tpu.memory_space<vmem>>, vector<1x128xf32>
    %18 = vector.broadcast %17 : vector<1x128xf32> to vector<8x128xf32>
    %19 = arith.addf %16, %18 : vector<8x128xf32>
    %c0_17 = arith.constant 0 : index
    %c0_18 = arith.constant 0 : index
    %20 = vector.load %arg8[%c0_17, %c0_18] : memref<8x128xf32, #tpu.memory_space<vmem>>, vector<8x128xf32>
    tpu.vector_store %arg8[%c0_17, %c0_18], %19 {strides = array<i32>} : memref<8x128xf32, #tpu.memory_space<vmem>>, vector<8x128xf32>,
    return
  }
  func.func @transform_0(%arg0: i32) -> (i32, i32) {
    %c0_i32 = arith.constant 0 : i32
    %c0_i32_0 = arith.constant 0 : i32
    return %arg0, %c0_i32 : i32, i32
  }
  func.func @transform_1(%arg0: i32) -> (i32, i32) {
    %c0_i32 = arith.constant 0 : i32
    %c0_i32_0 = arith.constant 0 : i32
    %c0_i32_1 = arith.constant 0 : i32
    return %c0_i32, %c0_i32_0 : i32, i32
  }
  func.func @transform_2(%arg0: i32) -> (i32, i32) {
    %c0_i32 = arith.constant 0 : i32
    %c0_i32_0 = arith.constant 0 : i32
    %c0_i32_1 = arith.constant 0 : i32
    return %c0_i32, %c0_i32_0 : i32, i32
  }
  func.func @transform_3(%arg0: i32) -> (i32, i32) {
    %c0_i32 = arith.constant 0 : i32
    %c0_i32_0 = arith.constant 0 : i32
    %c0_i32_1 = arith.constant 0 : i32
    return %c0_i32, %c0_i32_0 : i32, i32
  }
  func.func @transform_4(%arg0: i32) -> (i32, i32) {
    %c0_i32 = arith.constant 0 : i32
    %c0_i32_0 = arith.constant 0 : i32
    %c0_i32_1 = arith.constant 0 : i32
    return %c0_i32, %c0_i32_0 : i32, i32
  }
  func.func @transform_5(%arg0: i32) -> (i32, i32) {
    %c0_i32 = arith.constant 0 : i32
    %c0_i32_0 = arith.constant 0 : i32
    %c0_i32_1 = arith.constant 0 : i32
    return %c0_i32, %c0_i32_0 : i32, i32
  }
  func.func @transform_6(%arg0: i32) -> (i32, i32) {
    %c0_i32 = arith.constant 0 : i32
    %c0_i32_0 = arith.constant 0 : i32
    %c0_i32_1 = arith.constant 0 : i32
    return %c0_i32, %c0_i32_0 : i32, i32
  }
  func.func @transform_7(%arg0: i32) -> (i32, i32) {
    %c0_i32 = arith.constant 0 : i32
    %c0_i32_0 = arith.constant 0 : i32
    return %arg0, %c0_i32 : i32, i32
  }
}

</mosaic_0001>

<llo_original>
// kernel: qnetwork_forward.1
$region0: #{qnetwork_forward.1}
  #allocation0 [shape = 'u32[]', space=smem, size = 0x4, offset = 0x4, fixed_abs, tag = 'smem constant byte address 0x4 - core index']
  #allocation1 [shape = 'u32[144,128]{1,0:T(1,128)}', space=vmem, size = 0x12000, scoped, tag = 'internal scratch']
  %s0 = inlined_call_operand.vmem [shape: f32[8,8], index: 0, kind: input, shape index: {}]
  %s1 = inlined_call_operand.vmem [shape: f32[8,128], index: 1, kind: input, shape index: {}]
  %s2 = inlined_call_operand.vmem [shape: f32[1,128], index: 2, kind: input, shape index: {}]
  %s3 = inlined_call_operand.hbm [shape: f32[128,128], index: 3, kind: input, shape index: {}]
  %s4 = inlined_call_operand.vmem [shape: f32[1,128], index: 4, kind: input, shape index: {}]
  %s5 = inlined_call_operand.hbm [shape: f32[128,128], index: 5, kind: input, shape index: {}]
  %s6 = inlined_call_operand.vmem [shape: f32[1,128], index: 6, kind: input, shape index: {}]
  %s7 = inlined_call_operand.vmem [shape: f32[8,128], index: 7, kind: output, shape index: {}]
  %s8 = sld [smem:[#allocation0]]
  $region46: #{qnetwork_forward.1} parent=0
    _
  %s10 = ssub.s32 1, %s8
  %s11 = scalar_select 0, %s10, %s8
  $region1: #{qnetwork_forward.1} parent=0
    #allocation2 [shape = 'u8[65536]{0}', space=vmem, size = 0x10000, scoped, tag = 'input window, operand 3, single buffered']
    #allocation3 [shape = 's32[1]{0}', space=sflag, size = 0x4, scoped, tag = 'scoped memory for qnetwork_forward.1']
    #allocation4 [shape = 'u8[65536]{0}', space=vmem, size = 0x10000, scoped, tag = 'input window, operand 5, single buffered']
    #allocation5 [shape = 's32[1]{0}', space=sflag, size = 0x4, scoped, tag = 'scoped memory for qnetwork_forward.1']
    %12 = vsyncpa [#allocation3], 0
    %13 = vsyncpa [#allocation5], 0
    // Predicated region
    $region2: #{qnetwork_forward.1} parent=1 // pred_check
      _
    $region3: #{qnetwork_forward.1} parent=1 // pred_check_branch
      %15 = sbr.rel (0) target = $region5
    $region4: #{qnetwork_forward.1} parent=1 // pred_region
      _
    $region5: #{qnetwork_forward.1} parent=1 // pred_fallthru
      _
    // Predicated region
    $region6: #{qnetwork_forward.1} parent=1 // pred_check
      _
    $region7: #{qnetwork_forward.1} parent=1 // pred_check_branch
      %17 = sbr.rel (0) target = $region9
    $region8: #{qnetwork_forward.1} parent=1 // pred_region
      _
    $region9: #{qnetwork_forward.1} parent=1 // pred_fallthru
      _
    // Predicated region
    $region10: #{qnetwork_forward.1} parent=1 // pred_check
      _
    $region11: #{qnetwork_forward.1} parent=1 // pred_check_branch
      %19 = sbr.rel (0) target = $region13
    $region12: #{qnetwork_forward.1} parent=1 // pred_region
      _
    $region13: #{qnetwork_forward.1} parent=1 // pred_fallthru
      _
    // Predicated region
    $region14: #{qnetwork_forward.1} parent=1 // pred_check
      _
    $region15: #{qnetwork_forward.1} parent=1 // pred_check_branch
      %21 = sbr.rel (0) target = $region17
    $region16: #{qnetwork_forward.1} parent=1 // pred_region
      %s23 = ssub.s32 2048, 2048
      %24 = vsyncadd [#allocation3], %s23
      %s25 = sshll.u32 [#allocation2], 4
      %s26 = int_to_ptr.vmem [resolvable:$true] %s25
      %31 = dma.hbm_to_vmem [thread:$0]  %s3, 2048, %s26, [#allocation3], 128, 128, 8
    $region17: #{qnetwork_forward.1} parent=1 // pred_fallthru
      _
    // Predicated region
    $region18: #{qnetwork_forward.1} parent=1 // pred_check
      _
    $region19: #{qnetwork_forward.1} parent=1 // pred_check_branch
      %33 = sbr.rel (0) target = $region21
    $region20: #{qnetwork_forward.1} parent=1 // pred_region
      _
    $region21: #{qnetwork_forward.1} parent=1 // pred_fallthru
      _
    // Predicated region
    $region22: #{qnetwork_forward.1} parent=1 // pred_check
      _
    $region23: #{qnetwork_forward.1} parent=1 // pred_check_branch
      %35 = sbr.rel (0) target = $region25
    $region24: #{qnetwork_forward.1} parent=1 // pred_region
      %s37 = ssub.s32 2048, 2048
      %38 = vsyncadd [#allocation5], %s37
      %s39 = sshll.u32 [#allocation4], 4
      %s40 = int_to_ptr.vmem [resolvable:$true] %s39
      %45 = dma.hbm_to_vmem [thread:$0]  %s5, 2048, %s40, [#allocation5], 128, 128, 8
    $region25: #{qnetwork_forward.1} parent=1 // pred_fallthru
      _
    // Predicated region
    $region26: #{qnetwork_forward.1} parent=1 // pred_check
      _
    $region27: #{qnetwork_forward.1} parent=1 // pred_check_branch
      %47 = sbr.rel (0) target = $region29
    $region28: #{qnetwork_forward.1} parent=1 // pred_region
      _
    $region29: #{qnetwork_forward.1} parent=1 // pred_fallthru
      _
    // Predicated region
    $region30: #{qnetwork_forward.1} parent=1 // pred_check
      _
    $region31: #{qnetwork_forward.1} parent=1 // pred_check_branch
      %49 = sbr.rel (0) target = $region33
    $region32: #{qnetwork_forward.1} parent=1 // pred_region
      %50 = dma.done [#allocation3], 2048
    $region33: #{qnetwork_forward.1} parent=1 // pred_fallthru
      _
    // Predicated region
    $region34: #{qnetwork_forward.1} parent=1 // pred_check
      _
    $region35: #{qnetwork_forward.1} parent=1 // pred_check_branch
      %52 = sbr.rel (0) target = $region37
    $region36: #{qnetwork_forward.1} parent=1 // pred_region
      %53 = dma.done [#allocation5], 2048
    $region37: #{qnetwork_forward.1} parent=1 // pred_fallthru
      _
    %v54 = vld [vmem:[%s0] sm:$0xff]
    %v55 = vld [vmem:[%s1] sm:$0xff]
    %v56 = vld [vmem:[%s2] sm:$0x1]
    %v58 = vlaneseq
    %v59 = vshrl.u32 %v58, 7
    %v60 = vsub.s32 0, %v59
    %v61 = vrot.slane %v56, %v60
    %vm63 = vcmask 64512
    %v65 = vsel %vm63, %v54, 0
    %67 = vmatprep.subr.mxu0 0.0
    %68 = vmatpush1.msra.mxu0 %v55
    %69 = vmatprep.subr.mxu0 0.0
    %70 = vmatpush1.msra.mxu0 0.0
    %71 = vmatprep.subr.mxu0 0.0
    %72 = vmatpush1.msra.mxu0 0.0
    %73 = vmatprep.subr.mxu0 0.0
    %74 = vmatpush1.msra.mxu0 0.0
    %75 = vmatprep.subr.mxu0 0.0
    %76 = vmatpush1.msra.mxu0 0.0
    %77 = vmatprep.subr.mxu0 0.0
    %78 = vmatpush1.msra.mxu0 0.0
    %79 = vmatprep.subr.mxu0 0.0
    %80 = vmatpush1.msra.mxu0 0.0
    %81 = vmatprep.subr.mxu0 0.0
    %82 = vmatpush1.msra.mxu0 0.0
    %83 = vmatprep.subr.mxu0 0.0
    %84 = vmatpush1.msra.mxu0 0.0
    %85 = vmatprep.subr.mxu0 0.0
    %86 = vmatpush1.msra.mxu0 0.0
    %87 = vmatprep.subr.mxu0 0.0
    %88 = vmatpush1.msra.mxu0 0.0
    %89 = vmatprep.subr.mxu0 0.0
    %90 = vmatpush1.msra.mxu0 0.0
    %91 = vmatprep.subr.mxu0 0.0
    %92 = vmatpush1.msra.mxu0 0.0
    %93 = vmatprep.subr.mxu0 0.0
    %94 = vmatpush1.msra.mxu0 0.0
    %95 = vmatprep.subr.mxu0 0.0
    %96 = vmatpush1.msra.mxu0 0.0
    %97 = vmatprep.subr.mxu0 0.0
    %98 = vmatpush1.msra.mxu0 0.0
    %99 = vmatprep.subr.mxu0 0.0
    %100 = vmatpush1.msra.mxu0 0.0
    %101 = vmatprep.subr.mxu0 0.0
    %102 = vmatpush1.msra.mxu0 0.0
    %103 = vmatprep.subr.mxu0 0.0
    %104 = vmatpush1.msra.mxu0 0.0
    %105 = vmatprep.subr.mxu0 0.0
    %106 = vmatpush1.msra.mxu0 0.0
    %107 = vmatprep.subr.mxu0 0.0
    %108 = vmatpush1.msra.mxu0 0.0
    %109 = vmatprep.subr.mxu0 0.0
    %110 = vmatpush1.msra.mxu0 0.0
    %111 = vmatprep.subr.mxu0 0.0
    %112 = vmatpush1.msra.mxu0 0.0
    %113 = vmatprep.subr.mxu0 0.0
    %114 = vmatpush1.msra.mxu0 0.0
    %115 = vmatprep.subr.mxu0 0.0
    %116 = vmatpush1.msra.mxu0 0.0
    %117 = vmatprep.subr.mxu0 0.0
    %118 = vmatpush1.msra.mxu0 0.0
    %119 = vmatprep.subr.mxu0 0.0
    %120 = vmatpush1.msra.mxu0 0.0
    %121 = vmatprep.subr.mxu0 0.0
    %122 = vmatpush1.msra.mxu0 0.0
    %123 = vmatprep.subr.mxu0 0.0
    %124 = vmatpush1.msra.mxu0 0.0
    %125 = vmatprep.subr.mxu0 0.0
    %126 = vmatpush1.msra.mxu0 0.0
    %127 = vmatprep.subr.mxu0 0.0
    %128 = vmatpush1.msra.mxu0 0.0
    %129 = vmatprep.subr.mxu0 0.0
    %130 = vmatpush1.msra.mxu0 0.0
    %131 = vmatprep.mubr.f32.mxu0 0.0
    %132 = vmatmul.mubr.f32.gmra.mrb[0].mxu0 %v65
    %v133 = vpop.f32.mrb[0].mxu0
    %v134 = vadd.f32 %v61, %v133
    %v135 = vpop.f32.mrb[0].mxu0
    %136 = vdwg.mxu0
    %v137 = vmax.f32 %v134, 0.0
    %v138 = vld [vmem:[#allocation2] sm:$0xff]
    %v139 = vld [vmem:[#allocation2 + $0x8] sm:$0xff]
    %v140 = vld [vmem:[#allocation2 + $0x10] sm:$0xff]
    %v141 = vld [vmem:[#allocation2 + $0x18] sm:$0xff]
    %v142 = vld [vmem:[#allocation2 + $0x20] sm:$0xff]
    %v143 = vld [vmem:[#allocation2 + $0x28] sm:$0xff]
    %v144 = vld [vmem:[#allocation2 + $0x30] sm:$0xff]
    %v145 = vld [vmem:[#allocation2 + $0x38] sm:$0xff]
    %v146 = vld [vmem:[#allocation2 + $0x40] sm:$0xff]
    %v147 = vld [vmem:[#allocation2 + $0x48] sm:$0xff]
    %v148 = vld [vmem:[#allocation2 + $0x50] sm:$0xff]
    %v149 = vld [vmem:[#allocation2 + $0x58] sm:$0xff]
    %v150 = vld [vmem:[#allocation2 + $0x60] sm:$0xff]
    %v151 = vld [vmem:[#allocation2 + $0x68] sm:$0xff]
    %v152 = vld [vmem:[#allocation2 + $0x70] sm:$0xff]
    %v153 = vld [vmem:[#allocation2 + $0x78] sm:$0xff]
    %v154 = vld [vmem:[%s4] sm:$0x1]
    %v156 = vlaneseq
    %v157 = vshrl.u32 %v156, 7
    %v158 = vsub.s32 0, %v157
    %v159 = vrot.slane %v154, %v158
    %161 = vmatprep.subr.mxu0 0.0
    %162 = vmatpush1.msra.mxu0 %v138
    %163 = vmatprep.subr.mxu0 0.0
    %164 = vmatpush1.msra.mxu0 %v139
    %165 = vmatprep.subr.mxu0 0.0
    %166 = vmatpush1.msra.mxu0 %v140
    %167 = vmatprep.subr.mxu0 0.0
    %168 = vmatpush1.msra.mxu0 %v141
    %169 = vmatprep.subr.mxu0 0.0
    %170 = vmatpush1.msra.mxu0 %v142
    %171 = vmatprep.subr.mxu0 0.0
    %172 = vmatpush1.msra.mxu0 %v143
    %173 = vmatprep.subr.mxu0 0.0
    %174 = vmatpush1.msra.mxu0 %v144
    %175 = vmatprep.subr.mxu0 0.0
    %176 = vmatpush1.msra.mxu0 %v145
    %177 = vmatprep.subr.mxu0 0.0
    %178 = vmatpush1.msra.mxu0 %v146
    %179 = vmatprep.subr.mxu0 0.0
    %180 = vmatpush1.msra.mxu0 %v147
    %181 = vmatprep.subr.mxu0 0.0
    %182 = vmatpush1.msra.mxu0 %v148
    %183 = vmatprep.subr.mxu0 0.0
    %184 = vmatpush1.msra.mxu0 %v149
    %185 = vmatprep.subr.mxu0 0.0
    %186 = vmatpush1.msra.mxu0 %v150
    %187 = vmatprep.subr.mxu0 0.0
    %188 = vmatpush1.msra.mxu0 %v151
    %189 = vmatprep.subr.mxu0 0.0
    %190 = vmatpush1.msra.mxu0 %v152
    %191 = vmatprep.subr.mxu0 0.0
    %192 = vmatpush1.msra.mxu0 %v153
    %193 = vmatprep.subr.mxu0 0.0
    %194 = vmatpush1.msra.mxu0 0.0
    %195 = vmatprep.subr.mxu0 0.0
    %196 = vmatpush1.msra.mxu0 0.0
    %197 = vmatprep.subr.mxu0 0.0
    %198 = vmatpush1.msra.mxu0 0.0
    %199 = vmatprep.subr.mxu0 0.0
    %200 = vmatpush1.msra.mxu0 0.0
    %201 = vmatprep.subr.mxu0 0.0
    %202 = vmatpush1.msra.mxu0 0.0
    %203 = vmatprep.subr.mxu0 0.0
    %204 = vmatpush1.msra.mxu0 0.0
    %205 = vmatprep.subr.mxu0 0.0
    %206 = vmatpush1.msra.mxu0 0.0
    %207 = vmatprep.subr.mxu0 0.0
    %208 = vmatpush1.msra.mxu0 0.0
    %209 = vmatprep.subr.mxu0 0.0
    %210 = vmatpush1.msra.mxu0 0.0
    %211 = vmatprep.subr.mxu0 0.0
    %212 = vmatpush1.msra.mxu0 0.0
    %213 = vmatprep.subr.mxu0 0.0
    %214 = vmatpush1.msra.mxu0 0.0
    %215 = vmatprep.subr.mxu0 0.0
    %216 = vmatpush1.msra.mxu0 0.0
    %217 = vmatprep.subr.mxu0 0.0
    %218 = vmatpush1.msra.mxu0 0.0
    %219 = vmatprep.subr.mxu0 0.0
    %220 = vmatpush1.msra.mxu0 0.0
    %221 = vmatprep.subr.mxu0 0.0
    %222 = vmatpush1.msra.mxu0 0.0
    %223 = vmatprep.subr.mxu0 0.0
    %224 = vmatpush1.msra.mxu0 0.0
    %225 = vmatprep.mubr.f32.mxu0 0.0
    %226 = vmatmul.mubr.f32.gmra.mrb[0].mxu0 %v137
    %v227 = vpop.f32.mrb[0].mxu0
    %v228 = vadd.f32 %v159, %v227
    %v229 = vpop.f32.mrb[0].mxu0
    %230 = vdwg.mxu0
    %v231 = vmax.f32 %v228, 0.0
    %v232 = vld [vmem:[#allocation4] sm:$0xff]
    %v233 = vld [vmem:[#allocation4 + $0x8] sm:$0xff]
    %v234 = vld [vmem:[#allocation4 + $0x10] sm:$0xff]
    %v235 = vld [vmem:[#allocation4 + $0x18] sm:$0xff]
    %v236 = vld [vmem:[#allocation4 + $0x20] sm:$0xff]
    %v237 = vld [vmem:[#allocation4 + $0x28] sm:$0xff]
    %v238 = vld [vmem:[#allocation4 + $0x30] sm:$0xff]
    %v239 = vld [vmem:[#allocation4 + $0x38] sm:$0xff]
    %v240 = vld [vmem:[#allocation4 + $0x40] sm:$0xff]
    %v241 = vld [vmem:[#allocation4 + $0x48] sm:$0xff]
    %v242 = vld [vmem:[#allocation4 + $0x50] sm:$0xff]
    %v243 = vld [vmem:[#allocation4 + $0x58] sm:$0xff]
    %v244 = vld [vmem:[#allocation4 + $0x60] sm:$0xff]
    %v245 = vld [vmem:[#allocation4 + $0x68] sm:$0xff]
    %v246 = vld [vmem:[#allocation4 + $0x70] sm:$0xff]
    %v247 = vld [vmem:[#allocation4 + $0x78] sm:$0xff]
    %v248 = vld [vmem:[%s6] sm:$0x1]
    %v250 = vlaneseq
    %v251 = vshrl.u32 %v250, 7
    %v252 = vsub.s32 0, %v251
    %v253 = vrot.slane %v248, %v252
    %255 = vmatprep.subr.mxu0 0.0
    %256 = vmatpush1.msra.mxu0 %v232
    %257 = vmatprep.subr.mxu0 0.0
    %258 = vmatpush1.msra.mxu0 %v233
    %259 = vmatprep.subr.mxu0 0.0
    %260 = vmatpush1.msra.mxu0 %v234
    %261 = vmatprep.subr.mxu0 0.0
    %262 = vmatpush1.msra.mxu0 %v235
    %263 = vmatprep.subr.mxu0 0.0
    %264 = vmatpush1.msra.mxu0 %v236
    %265 = vmatprep.subr.mxu0 0.0
    %266 = vmatpush1.msra.mxu0 %v237
    %267 = vmatprep.subr.mxu0 0.0
    %268 = vmatpush1.msra.mxu0 %v238
    %269 = vmatprep.subr.mxu0 0.0
    %270 = vmatpush1.msra.mxu0 %v239
    %271 = vmatprep.subr.mxu0 0.0
    %272 = vmatpush1.msra.mxu0 %v240
    %273 = vmatprep.subr.mxu0 0.0
    %274 = vmatpush1.msra.mxu0 %v241
    %275 = vmatprep.subr.mxu0 0.0
    %276 = vmatpush1.msra.mxu0 %v242
    %277 = vmatprep.subr.mxu0 0.0
    %278 = vmatpush1.msra.mxu0 %v243
    %279 = vmatprep.subr.mxu0 0.0
    %280 = vmatpush1.msra.mxu0 %v244
    %281 = vmatprep.subr.mxu0 0.0
    %282 = vmatpush1.msra.mxu0 %v245
    %283 = vmatprep.subr.mxu0 0.0
    %284 = vmatpush1.msra.mxu0 %v246
    %285 = vmatprep.subr.mxu0 0.0
    %286 = vmatpush1.msra.mxu0 %v247
    %287 = vmatprep.subr.mxu0 0.0
    %288 = vmatpush1.msra.mxu0 0.0
    %289 = vmatprep.subr.mxu0 0.0
    %290 = vmatpush1.msra.mxu0 0.0
    %291 = vmatprep.subr.mxu0 0.0
    %292 = vmatpush1.msra.mxu0 0.0
    %293 = vmatprep.subr.mxu0 0.0
    %294 = vmatpush1.msra.mxu0 0.0
    %295 = vmatprep.subr.mxu0 0.0
    %296 = vmatpush1.msra.mxu0 0.0
    %297 = vmatprep.subr.mxu0 0.0
    %298 = vmatpush1.msra.mxu0 0.0
    %299 = vmatprep.subr.mxu0 0.0
    %300 = vmatpush1.msra.mxu0 0.0
    %301 = vmatprep.subr.mxu0 0.0
    %302 = vmatpush1.msra.mxu0 0.0
    %303 = vmatprep.subr.mxu0 0.0
    %304 = vmatpush1.msra.mxu0 0.0
    %305 = vmatprep.subr.mxu0 0.0
    %306 = vmatpush1.msra.mxu0 0.0
    %307 = vmatprep.subr.mxu0 0.0
    %308 = vmatpush1.msra.mxu0 0.0
    %309 = vmatprep.subr.mxu0 0.0
    %310 = vmatpush1.msra.mxu0 0.0
    %311 = vmatprep.subr.mxu0 0.0
    %312 = vmatpush1.msra.mxu0 0.0
    %313 = vmatprep.subr.mxu0 0.0
    %314 = vmatpush1.msra.mxu0 0.0
    %315 = vmatprep.subr.mxu0 0.0
    %316 = vmatpush1.msra.mxu0 0.0
    %317 = vmatprep.subr.mxu0 0.0
    %318 = vmatpush1.msra.mxu0 0.0
    %319 = vmatprep.mubr.f32.mxu0 0.0
    %320 = vmatmul.mubr.f32.gmra.mrb[0].mxu0 %v231
    %v321 = vpop.f32.mrb[0].mxu0
    %v322 = vadd.f32 %v253, %v321
    %v323 = vpop.f32.mrb[0].mxu0
    %324 = vdwg.mxu0
    %325 = vst [vmem:[%s7] sm:$0xff] %v322
    // Predicated region
    $region38: #{qnetwork_forward.1} parent=1 // pred_check
      _
    $region39: #{qnetwork_forward.1} parent=1 // pred_check_branch
      %327 = sbr.rel (0) target = $region41
    $region40: #{qnetwork_forward.1} parent=1 // pred_region
      _
    $region41: #{qnetwork_forward.1} parent=1 // pred_fallthru
      _
    // Predicated region
    $region42: #{qnetwork_forward.1} parent=1 // pred_check
      _
    $region43: #{qnetwork_forward.1} parent=1 // pred_check_branch
      %329 = sbr.rel (0) target = $region45
    $region44: #{qnetwork_forward.1} parent=1 // pred_region
      _
    $region45: #{qnetwork_forward.1} parent=1 // pred_fallthru
      _
    %330 = vsyncpa [#allocation3], 1
    %331 = vsyncpa [#allocation5], 1

</llo_original>
